<compile_context>
chip_gen: v6e
topology: v6e:2x2x1
jax: 0.10.0
libtpu: 0.0.40
codegen_flags: <defaults>
</compile_context>

<pallas_src>
import jax
import jax.numpy as jnp
from jax.experimental import pallas as pl
from jax.experimental.pallas import tpu as pltpu


def _round_up(x, m):
    return (x + m - 1) // m * m


def _sublane(dtype):
    return {4: 8, 2: 16, 1: 32}.get(jnp.dtype(dtype).itemsize, 8)


def _vmem_caps():
    """(usable budget, physical cap) in bytes, with headroom for Mosaic scratch."""
    cap = 64 << 20  # conservative default = v7x per-TC VMEM
    try:
        info = pltpu.get_tpu_info()
        cap = int(getattr(info, "vmem_capacity_bytes", cap))
    except Exception:
        pass
    budget = min(cap - (8 << 20), (cap * 7) // 8)
    return budget, cap


def highway_kernel(x1_ref, x2_ref, wt_ref, b_ref, o_ref):
    # x1_ref : (tm, H)    full contraction rows for this M tile (reused over j)
    # x2_ref : (tm, tn)   output-aligned tile
    # wt_ref : (H, H) resident W.T  OR  (H, tn) streamed column block of W.T
    # b_ref  : (1, H)     resident bias
    # o_ref  : (tm, tn)
    tn = o_ref.shape[1]
    j = pl.program_id(1)
    off = pl.multiple_of(j * tn, tn)

    if wt_ref.shape[1] == tn:
        w_blk = wt_ref[...]                       # streamed (or tn == H)
    else:
        w_blk = wt_ref[:, pl.ds(off, tn)]         # slice resident W.T lanes

    z = jnp.dot(x1_ref[...], w_blk, preferred_element_type=jnp.float32)
    z = z + b_ref[:, pl.ds(off, tn)].astype(jnp.float32)
    gate = jax.nn.sigmoid(z)

    x1_t = x1_ref[:, pl.ds(off, tn)].astype(jnp.float32)
    x2_t = x2_ref[...].astype(jnp.float32)

    # gate*x2 + (1-gate)*x1  ==  x1 + gate*(x2 - x1)
    o_ref[...] = (x1_t + gate * (x2_t - x1_t)).astype(o_ref.dtype)


def highway(x1, x2, w, b, *, tm=None, tn=None):
    """x1, x2: (B, H). w: (H, H) PyTorch nn.Linear weight (out, in). b: (H,)."""
    B, H = x1.shape
    assert x2.shape == (B, H) and w.shape == (H, H) and b.shape == (H,)

    itemsize = jnp.dtype(x1.dtype).itemsize
    sub = _sublane(x1.dtype)
    budget, cap = _vmem_caps()

    # ---- lane tile ----
    if tn is None:
        if H % 512 == 0 and B <= 64:
            tn = 512                  # amortize per-step overhead for tiny batches
        elif H % 256 == 0:
            tn = 256
        elif H % 128 == 0:
            tn = 128
        else:
            tn = H                    # odd H: single full-width lane tile
    assert H % tn == 0

    # ---- sublane tile: dtype-aware rounding, big M tiles to feed the MXU ----
    if tm is None:
        tm = min(512, _round_up(B, sub))
    tm = max(sub, _round_up(tm, sub))

    def _bytes(tm_, resident):
        # Conservative: budget 2 buffers for every operand (resident blocks dedup
        # the DMA but we still leave room so Mosaic never runs out).
        w_term = H * H if resident else H * tn
        return (2 * (tm_ * H + 2 * tm_ * tn + w_term) * itemsize
                + 2 * H * jnp.dtype(b.dtype).itemsize)

    # ---- prefer W fully VMEM-resident: HBM-read exactly once for the whole grid ----
    resident = _bytes(tm, True) <= budget
    if not resident:
        for tm_try in (256, 128, 64):
            tm_try = max(sub, _round_up(tm_try, sub))
            if tm_try < tm and _bytes(tm_try, True) <= budget:
                tm, resident = tm_try, True
                break
    if not resident:
        # Stream W.T column blocks; shrink tm until the working set fits.
        while tm > sub and _bytes(tm, False) > budget:
            tm = max(sub, _round_up(tm // 2, sub))
        if _bytes(tm, False) > budget:
            # TODO(synk): K-tiled accumulator path for very large H.
            raise NotImplementedError("H too large for the non-K-tiled Highway kernel")
        if H % 128 != 0:
            raise NotImplementedError("non-128-multiple H only supported with resident W")

    wt = w.T                 # one-time HBM-side transpose -> plain (K, N) MXU operand
    b2d = b.reshape(1, H)

    grid = (pl.cdiv(B, tm), H // tn)   # ragged B: Pallas masks the partial edge block

    if resident:
        w_spec = pl.BlockSpec((H, H), lambda i, j: (0, 0))     # resident, DMA'd once
    else:
        w_spec = pl.BlockSpec((H, tn), lambda i, j: (0, j))    # streamed column blocks

    vmem_limit = int(min(cap, max(_bytes(tm, resident) + (4 << 20), 32 << 20)))

    return pl.pallas_call(
        highway_kernel,
        out_shape=jax.ShapeDtypeStruct((B, H), x1.dtype),
        grid_spec=pltpu.PrefetchScalarGridSpec(
            num_scalar_prefetch=0,
            grid=grid,
            in_specs=[
                pl.BlockSpec((tm, H), lambda i, j: (i, 0)),    # x1 rows (full K), reused over j
                pl.BlockSpec((tm, tn), lambda i, j: (i, j)),   # x2 tile
                w_spec,                                        # W.T (resident or streamed)
                pl.BlockSpec((1, H), lambda i, j: (0, 0)),     # bias, resident
            ],
            out_specs=pl.BlockSpec((tm, tn), lambda i, j: (i, j)),
        ),
        compiler_params=pltpu.CompilerParams(
            dimension_semantics=("parallel", "parallel"),
            vmem_limit_bytes=vmem_limit,
        ),
    )(x1, x2, wt, b2d)


def highway_ref(x1, x2, w, b):
    gate = jax.nn.sigmoid(x1 @ w.T + b)
    return gate * x2 + (1.0 - gate) * x1


if __name__ == "__main__":
    H = 128  # x_hidden

    key = jax.random.PRNGKey(0)
    k1, k2, k3, k4 = jax.random.split(key, 4)

    # Deterministic init mirroring nn.Linear default: U(-1/sqrt(H), 1/sqrt(H))
    bound = 1.0 / jnp.sqrt(jnp.float32(H))
    w = jax.random.uniform(k3, (H, H), jnp.float32, -bound, bound)
    b = jax.random.uniform(k4, (H,), jnp.float32, -bound, bound)

    # Aligned batch
    B = 16
    x1 = jax.random.normal(k1, (B, H), dtype=jnp.float32)
    x2 = jax.random.normal(k2, (B, H), dtype=jnp.float32)
    out = jax.block_until_ready(highway(x1, x2, w, b))
    ref = highway_ref(x1, x2, w, b)
    assert out.shape == (B, H)
    assert jnp.allclose(out, ref, atol=1e-5, rtol=1e-5), "mismatch (aligned B)"

    # Ragged batch (exercises the edge-block masking path — no padding copies)
    Br = 20
    x1r = jax.random.normal(k1, (Br, H), dtype=jnp.float32)
    x2r = jax.random.normal(k2, (Br, H), dtype=jnp.float32)
    outr = jax.block_until_ready(highway(x1r, x2r, w, b))
    refr = highway_ref(x1r, x2r, w, b)
    assert outr.shape == (Br, H)
    assert jnp.allclose(outr, refr, atol=1e-5, rtol=1e-5), "mismatch (ragged B)"

    print("KERNEL_OK")
</pallas_src>

<mosaic_0001>
module attributes {stable_mosaic.version = 11 : i64} {
  func.func @highway_kernel(%arg0: i32, %arg1: i32, %arg2: memref<16x128xf32, #tpu.memory_space<vmem>>, %arg3: memref<16x128xf32, #tpu.memory_space<vmem>>, %arg4: memref<128x128xf32, #tpu.memory_space<vmem>>, %arg5: memref<1x128xf32, #tpu.memory_space<vmem>>, %arg6: memref<16x128xf32, #tpu.memory_space<vmem>>) attributes {dimension_semantics = [#tpu.dimension_semantics<parallel>, #tpu.dimension_semantics<parallel>], iteration_bounds = array<i64: 1, 1>, scalar_prefetch = 0 : i64, scratch_operands = 0 : i64, tpu.core_type = #tpu.core_type<tc>, window_params = [{transform_indices = @transform_0, window_bounds = array<i64: 16, 128>}, {transform_indices = @transform_1, window_bounds = array<i64: 16, 128>}, {pipeline_mode = #tpu.pipeline_mode<synchronous>, transform_indices = @transform_2, window_bounds = array<i64: 128, 128>}, {pipeline_mode = #tpu.pipeline_mode<synchronous>, transform_indices = @transform_3, window_bounds = array<i64: 1, 128>}, {transform_indices = @transform_4, window_bounds = array<i64: 16, 128>}]} {
    %c128_i32 = arith.constant 128 : i32
    %0 = arith.muli %arg1, %c128_i32 : i32
    %1 = tpu.assume_multiple %0, 128 : i32
    %c0 = arith.constant 0 : index
    %c0_0 = arith.constant 0 : index
    %2 = vector.load %arg4[%c0, %c0_0] : memref<128x128xf32, #tpu.memory_space<vmem>>, vector<128x128xf32>
    %c0_1 = arith.constant 0 : index
    %c0_2 = arith.constant 0 : index
    %3 = vector.load %arg2[%c0_1, %c0_2] : memref<16x128xf32, #tpu.memory_space<vmem>>, vector<16x128xf32>
    %cst = arith.constant dense<0.000000e+00> : vector<16x128xf32>
    %4 = tpu.matmul %3, %2, %cst {dimension_numbers = #tpu.dot_dimension_numbers<[1], [0], [0], [1], [0, 0, 1, 1], [], []>} : vector<16x128xf32>, vector<128x128xf32>, vector<16x128xf32> -> vector<16x128xf32>
    %c0_3 = arith.constant 0 : index
    %5 = arith.index_cast %1 : i32 to index
    %6 = vector.load %arg5[%c0_3, %5] : memref<1x128xf32, #tpu.memory_space<vmem>>, vector<1x128xf32>
    %7 = vector.broadcast %6 : vector<1x128xf32> to vector<16x128xf32>
    %8 = arith.addf %4, %7 : vector<16x128xf32>
    %9 = arith.negf %8 : vector<16x128xf32>
    %10 = math.exp %9 : vector<16x128xf32>
    %cst_4 = arith.constant 1.000000e+00 : f32
    %11 = vector.broadcast %cst_4 : f32 to vector<16x128xf32>
    %12 = arith.addf %11, %10 : vector<16x128xf32>
    %13 = arith.divf %11, %12 : vector<16x128xf32>
    %c0_5 = arith.constant 0 : index
    %14 = arith.index_cast %1 : i32 to index
    %15 = vector.load %arg2[%c0_5, %14] : memref<16x128xf32, #tpu.memory_space<vmem>>, vector<16x128xf32>
    %c0_6 = arith.constant 0 : index
    %c0_7 = arith.constant 0 : index
    %16 = vector.load %arg3[%c0_6, %c0_7] : memref<16x128xf32, #tpu.memory_space<vmem>>, vector<16x128xf32>
    %17 = arith.subf %16, %15 : vector<16x128xf32>
    %18 = arith.mulf %13, %17 : vector<16x128xf32>
    %19 = arith.addf %15, %18 : vector<16x128xf32>
    %c0_8 = arith.constant 0 : index
    %c0_9 = arith.constant 0 : index
    %20 = vector.load %arg6[%c0_8, %c0_9] : memref<16x128xf32, #tpu.memory_space<vmem>>, vector<16x128xf32>
    tpu.vector_store %arg6[%c0_8, %c0_9], %19 {strides = array<i32>} : memref<16x128xf32, #tpu.memory_space<vmem>>, vector<16x128xf32>,
    return
  }
  func.func @transform_0(%arg0: i32, %arg1: i32) -> (i32, i32) {
    %c0_i32 = arith.constant 0 : i32
    %c0_i32_0 = arith.constant 0 : i32
    return %arg0, %c0_i32 : i32, i32
  }
  func.func @transform_1(%arg0: i32, %arg1: i32) -> (i32, i32) {
    %c0_i32 = arith.constant 0 : i32
    return %arg0, %arg1 : i32, i32
  }
  func.func @transform_2(%arg0: i32, %arg1: i32) -> (i32, i32) {
    %c0_i32 = arith.constant 0 : i32
    %c0_i32_0 = arith.constant 0 : i32
    %c0_i32_1 = arith.constant 0 : i32
    return %c0_i32, %c0_i32_0 : i32, i32
  }
  func.func @transform_3(%arg0: i32, %arg1: i32) -> (i32, i32) {
    %c0_i32 = arith.constant 0 : i32
    %c0_i32_0 = arith.constant 0 : i32
    %c0_i32_1 = arith.constant 0 : i32
    return %c0_i32, %c0_i32_0 : i32, i32
  }
  func.func @transform_4(%arg0: i32, %arg1: i32) -> (i32, i32) {
    %c0_i32 = arith.constant 0 : i32
    return %arg0, %arg1 : i32, i32
  }
}

</mosaic_0001>

<llo_original>
// kernel: tpu_custom_call.1
$region0: #{tpu_custom_call.1}
  #allocation0 [shape = 'u32[]', space=smem, size = 0x4, offset = 0x4, fixed_abs, tag = 'smem constant byte address 0x4 - core index']
  #allocation1 [shape = 'u32[144,128]{1,0:T(1,128)}', space=vmem, size = 0x12000, scoped, tag = 'internal scratch']
  %s0 = inlined_call_operand.hbm [shape: f32[16,128], index: 0, kind: input, shape index: {}]
  %s1 = inlined_call_operand.hbm [shape: f32[16,128], index: 1, kind: input, shape index: {}]
  %s2 = inlined_call_operand.hbm [shape: f32[128,128], index: 2, kind: input, shape index: {}]
  %s3 = inlined_call_operand.vmem [shape: f32[1,128], index: 3, kind: input, shape index: {}]
  %s4 = inlined_call_operand.hbm [shape: f32[16,128], index: 4, kind: output, shape index: {}]
  %s5 = sld [smem:[#allocation0]]
  $region38: #{tpu_custom_call.1} parent=0
    _
  %s7 = ssub.s32 1, %s5
  %s8 = scalar_select 0, %s7, %s5
  $region1: #{tpu_custom_call.1} parent=0
    #allocation2 [shape = 'u8[8192]{0}', space=vmem, size = 0x2000, scoped, tag = 'input window, operand 0, single buffered']
    #allocation3 [shape = 's32[1]{0}', space=sflag, size = 0x4, scoped, tag = 'scoped memory for tpu_custom_call.1']
    #allocation4 [shape = 's32[1]{0}', space=sflag, size = 0x4, scoped, tag = 'scoped memory for tpu_custom_call.1']
    #allocation5 [shape = 'u8[8192]{0}', space=vmem, size = 0x2000, scoped, tag = 'input window, operand 1, single buffered']
    #allocation6 [shape = 's32[1]{0}', space=sflag, size = 0x4, scoped, tag = 'scoped memory for tpu_custom_call.1']
    #allocation7 [shape = 'u8[65536]{0}', space=vmem, size = 0x10000, scoped, tag = 'input window, operand 2, single buffered']
    #allocation8 [shape = 'u8[8192]{0}', space=vmem, size = 0x2000, scoped, tag = 'output window, operand 0, single buffered']
    %9 = vsyncpa [#allocation3], 0
    %10 = vsyncpa [#allocation6], 0
    %11 = vsyncpa [#allocation4], 0
    // Predicated region
    $region2: #{tpu_custom_call.1} parent=1 // pred_check
      _
    $region3: #{tpu_custom_call.1} parent=1 // pred_check_branch
      %13 = sbr.rel (0) target = $region5
    $region4: #{tpu_custom_call.1} parent=1 // pred_region
      %s15 = ssub.s32 256, 256
      %16 = vsyncadd [#allocation3], %s15
      %s17 = sshll.u32 [#allocation2], 4
      %s18 = int_to_ptr.vmem [resolvable:$true] %s17
      %23 = dma.hbm_to_vmem [thread:$0]  %s0, 256, %s18, [#allocation3], 128, 128, 8
    $region5: #{tpu_custom_call.1} parent=1 // pred_fallthru
      _
    // Predicated region
    $region6: #{tpu_custom_call.1} parent=1 // pred_check
      _
    $region7: #{tpu_custom_call.1} parent=1 // pred_check_branch
      %25 = sbr.rel (0) target = $region9
    $region8: #{tpu_custom_call.1} parent=1 // pred_region
      %s27 = ssub.s32 256, 256
      %28 = vsyncadd [#allocation6], %s27
      %s29 = sshll.u32 [#allocation5], 4
      %s30 = int_to_ptr.vmem [resolvable:$true] %s29
      %35 = dma.hbm_to_vmem [thread:$0]  %s1, 256, %s30, [#allocation6], 128, 128, 8
    $region9: #{tpu_custom_call.1} parent=1 // pred_fallthru
      _
    // Predicated region
    $region10: #{tpu_custom_call.1} parent=1 // pred_check
      _
    $region11: #{tpu_custom_call.1} parent=1 // pred_check_branch
      %37 = sbr.rel (0) target = $region13
    $region12: #{tpu_custom_call.1} parent=1 // pred_region
      %s39 = ssub.s32 2048, 2048
      %40 = vsyncadd [#allocation6], %s39
      %s41 = sshll.u32 [#allocation7], 4
      %s42 = int_to_ptr.vmem [resolvable:$true] %s41
      %47 = dma.hbm_to_vmem [thread:$0]  %s2, 2048, %s42, [#allocation6], 128, 128, 8
    $region13: #{tpu_custom_call.1} parent=1 // pred_fallthru
      _
    // Predicated region
    $region14: #{tpu_custom_call.1} parent=1 // pred_check
      _
    $region15: #{tpu_custom_call.1} parent=1 // pred_check_branch
      %49 = sbr.rel (0) target = $region17
    $region16: #{tpu_custom_call.1} parent=1 // pred_region
      _
    $region17: #{tpu_custom_call.1} parent=1 // pred_fallthru
      _
    // Predicated region
    $region18: #{tpu_custom_call.1} parent=1 // pred_check
      _
    $region19: #{tpu_custom_call.1} parent=1 // pred_check_branch
      %51 = sbr.rel (0) target = $region21
    $region20: #{tpu_custom_call.1} parent=1 // pred_region
      %52 = dma.done [#allocation3], 256
    $region21: #{tpu_custom_call.1} parent=1 // pred_fallthru
      _
    // Predicated region
    $region22: #{tpu_custom_call.1} parent=1 // pred_check
      _
    $region23: #{tpu_custom_call.1} parent=1 // pred_check_branch
      %54 = sbr.rel (0) target = $region25
    $region24: #{tpu_custom_call.1} parent=1 // pred_region
      %55 = dma.done [#allocation6], 256
    $region25: #{tpu_custom_call.1} parent=1 // pred_fallthru
      _
    // Predicated region
    $region26: #{tpu_custom_call.1} parent=1 // pred_check
      _
    $region27: #{tpu_custom_call.1} parent=1 // pred_check_branch
      %57 = sbr.rel (0) target = $region29
    $region28: #{tpu_custom_call.1} parent=1 // pred_region
      %58 = dma.done [#allocation6], 2048
    $region29: #{tpu_custom_call.1} parent=1 // pred_fallthru
      _
    %s59 = smul.u32 0, 128
    %v60 = vld [vmem:[#allocation7] sm:$0xff]
    %v61 = vld [vmem:[#allocation7 + $0x8] sm:$0xff]
    %v62 = vld [vmem:[#allocation7 + $0x10] sm:$0xff]
    %v63 = vld [vmem:[#allocation7 + $0x18] sm:$0xff]
    %v64 = vld [vmem:[#allocation7 + $0x20] sm:$0xff]
    %v65 = vld [vmem:[#allocation7 + $0x28] sm:$0xff]
    %v66 = vld [vmem:[#allocation7 + $0x30] sm:$0xff]
    %v67 = vld [vmem:[#allocation7 + $0x38] sm:$0xff]
    %v68 = vld [vmem:[#allocation7 + $0x40] sm:$0xff]
    %v69 = vld [vmem:[#allocation7 + $0x48] sm:$0xff]
    %v70 = vld [vmem:[#allocation7 + $0x50] sm:$0xff]
    %v71 = vld [vmem:[#allocation7 + $0x58] sm:$0xff]
    %v72 = vld [vmem:[#allocation7 + $0x60] sm:$0xff]
    %v73 = vld [vmem:[#allocation7 + $0x68] sm:$0xff]
    %v74 = vld [vmem:[#allocation7 + $0x70] sm:$0xff]
    %v75 = vld [vmem:[#allocation7 + $0x78] sm:$0xff]
    %v76 = vld [vmem:[#allocation2] sm:$0xff]
    %v77 = vld [vmem:[#allocation2 + $0x8] sm:$0xff]
    %s78 = sshra.s32 %s59, 7
    %s79 = sand.u32 %s59, 127
    %s80 = scalar_lea.vmem %s3, %s78
    %v81 = vld [vmem:[%s80] sm:$0x1]
    %v83 = vlaneseq
    %v84 = vshrl.u32 %v83, 7
    %v85 = vsub.s32 0, %v84
    %v86 = vrot.slane %v81, %v85
    %88 = vmatprep.subr.mxu0 0.0
    %89 = vmatpush1.msra.mxu0 %v75
    %90 = vmatprep.subr.mxu0 0.0
    %91 = vmatpush1.msra.mxu0 %v74
    %92 = vmatprep.subr.mxu0 0.0
    %93 = vmatpush1.msra.mxu0 %v73
    %94 = vmatprep.subr.mxu0 0.0
    %95 = vmatpush1.msra.mxu0 %v72
    %96 = vmatprep.subr.mxu0 0.0
    %97 = vmatpush1.msra.mxu0 %v71
    %98 = vmatprep.subr.mxu0 0.0
    %99 = vmatpush1.msra.mxu0 %v70
    %100 = vmatprep.subr.mxu0 0.0
    %101 = vmatpush1.msra.mxu0 %v69
    %102 = vmatprep.subr.mxu0 0.0
    %103 = vmatpush1.msra.mxu0 %v68
    %104 = vmatprep.subr.mxu0 0.0
    %105 = vmatpush1.msra.mxu0 %v67
    %106 = vmatprep.subr.mxu0 0.0
    %107 = vmatpush1.msra.mxu0 %v66
    %108 = vmatprep.subr.mxu0 0.0
    %109 = vmatpush1.msra.mxu0 %v65
    %110 = vmatprep.subr.mxu0 0.0
    %111 = vmatpush1.msra.mxu0 %v64
    %112 = vmatprep.subr.mxu0 0.0
    %113 = vmatpush1.msra.mxu0 %v63
    %114 = vmatprep.subr.mxu0 0.0
    %115 = vmatpush1.msra.mxu0 %v62
    %116 = vmatprep.subr.mxu0 0.0
    %117 = vmatpush1.msra.mxu0 %v61
    %118 = vmatprep.subr.mxu0 0.0
    %119 = vmatpush1.msra.mxu0 %v60
    %120 = vmatprep.subr.mxu0 0.0
    %121 = vmatpush2.msra.mxu0 0.0
    %122 = vmatprep.subr.mxu0 0.0
    %123 = vmatpush2.msra.mxu0 0.0
    %124 = vmatprep.subr.mxu0 0.0
    %125 = vmatpush2.msra.mxu0 0.0
    %126 = vmatprep.subr.mxu0 0.0
    %127 = vmatpush2.msra.mxu0 0.0
    %128 = vmatprep.subr.mxu0 0.0
    %129 = vmatpush2.msra.mxu0 0.0
    %130 = vmatprep.subr.mxu0 0.0
    %131 = vmatpush2.msra.mxu0 0.0
    %132 = vmatprep.subr.mxu0 0.0
    %133 = vmatpush2.msra.mxu0 0.0
    %134 = vmatprep.subr.mxu0 0.0
    %135 = vmatpush2.msra.mxu0 0.0
    %136 = vmatprep.subr.mxu0 0.0
    %137 = vmatpush2.msra.mxu0 0.0
    %138 = vmatprep.subr.mxu0 0.0
    %139 = vmatpush2.msra.mxu0 0.0
    %140 = vmatprep.subr.mxu0 0.0
    %141 = vmatpush2.msra.mxu0 0.0
    %142 = vmatprep.subr.mxu0 0.0
    %143 = vmatpush2.msra.mxu0 0.0
    %144 = vmatprep.subr.mxu0 0.0
    %145 = vmatpush2.msra.mxu0 0.0
    %146 = vmatprep.subr.mxu0 0.0
    %147 = vmatpush2.msra.mxu0 0.0
    %148 = vmatprep.subr.mxu0 0.0
    %149 = vmatpush2.msra.mxu0 0.0
    %150 = vmatprep.subr.mxu0 0.0
    %151 = vmatpush2.msra.mxu0 0.0
    %152 = vmatprep.mubr.f32.mxu0 0.0
    %153 = vmatmul.mubr.f32.gmra.mxu0 %v76
    %v154 = vpop.f32.mrf.mxu0
    %v155 = vadd.f32 %v86, %v154
    %v156 = vpop.f32.mrf.mxu0
    %157 = vmatprep.mubr.f32.mxu0 0.0
    %158 = vmatmul.mubr.f32.gmra.mxu0 %v77
    %v159 = vpop.f32.mrf.mxu0
    %v160 = vadd.f32 %v86, %v159
    %v161 = vpop.f32.mrf.mxu0
    %162 = vdwg.mxu0
    %v163 = vxor.u32 %v155, 2147483648
    %v164 = vxor.u32 %v160, 2147483648
    %v165 = vmul.f32 %v163, 1.442695
    %v166 = vpow.pop %v165
    %v167 = vmul.f32 %v164, 1.442695
    %v168 = vpow.pop %v167
    %v169 = vadd.f32 %v166, 1.0
    %v170 = vadd.f32 %v168, 1.0
    %v171 = vrcp.pop %v169
    %v172 = vmul.f32 1.0, %v171
    %v173 = vrcp.pop %v170
    %v174 = vmul.f32 1.0, %v173
    %s175 = scalar_lea.vmem [#allocation2], %s78
    %v176 = vld [vmem:[%s175] sm:$0xff]
    %v177 = vld [vmem:[%s175 + $0x8] sm:$0xff]
    %v178 = vld [vmem:[#allocation5] sm:$0xff]
    %v179 = vld [vmem:[#allocation5 + $0x8] sm:$0xff]
    %v180 = vsub.f32 %v178, %v176
    %v181 = vsub.f32 %v179, %v177
    %v182 = vmul.f32 %v172, %v180
    %v183 = vmul.f32 %v174, %v181
    %v184 = vadd.f32 %v176, %v182
    %v185 = vadd.f32 %v177, %v183
    %186 = vst [vmem:[#allocation8] sm:$0xff] %v184
    %187 = vst [vmem:[#allocation8 + $0x8] sm:$0xff] %v185
    // Predicated region
    $region30: #{tpu_custom_call.1} parent=1 // pred_check
      _
    $region31: #{tpu_custom_call.1} parent=1 // pred_check_branch
      %189 = sbr.rel (0) target = $region33
    $region32: #{tpu_custom_call.1} parent=1 // pred_region
      %s191 = ssub.s32 256, 256
      %192 = vsyncadd [#allocation4], %s191
      %s193 = sshll.u32 [#allocation8], 4
      %s194 = int_to_ptr.vmem [resolvable:$true] %s193
      %199 = dma.vmem_to_hbm [thread:$0]  %s194, 256, %s4, [#allocation4], 128, 128, 8
    $region33: #{tpu_custom_call.1} parent=1 // pred_fallthru
      _
    // Predicated region
    $region34: #{tpu_custom_call.1} parent=1 // pred_check
      _
    $region35: #{tpu_custom_call.1} parent=1 // pred_check_branch
      %201 = sbr.rel (0) target = $region37
    $region36: #{tpu_custom_call.1} parent=1 // pred_region
      %202 = dma.done [#allocation4], 256
    $region37: #{tpu_custom_call.1} parent=1 // pred_fallthru
      _
    %203 = vsyncpa [#allocation3], 1
    %204 = vsyncpa [#allocation6], 1
    %205 = vsyncpa [#allocation4], 1

</llo_original>
